<compile_context>
chip_gen: v7x
topology: tpu7x:2x2x1
jax: 0.10.0
libtpu: 0.0.40
codegen_flags: <defaults>
</compile_context>

<pallas_src>
import jax
import jax.numpy as jnp
from jax import lax
from jax.experimental import pallas as pl
from jax.experimental.pallas import tpu as pltpu

LANE = 128  # TPU lane width; output-channel slab padded to a multiple of this.


def _textcnn_fused_kernel(x_ref, *refs):
    """Fused TextCNN encoder for one batch element.

    x_ref : (1, D, L)        embeddings in PyTorch NCW layout (word_dim on sublanes).
    refs  : (w_0, b_0, w_1, b_1, ..., o_ref)
        w_b   : (K_b*D, CP)  im2col-packed conv weights, zero outside branch b's columns.
        b_b   : (1, CP)      conv bias (f32), zero outside branch b's columns.
        o_ref : (1, 1, CP)   pooled output row for this batch element (f32).
    """
    o_ref = refs[-1]
    branch_refs = refs[:-1]
    n_branches = len(branch_refs) // 2

    x2 = x_ref[0]                               # (D, L)
    D, L = x2.shape
    cp = o_ref.shape[-1]

    total = jnp.zeros((1, cp), jnp.float32)
    for b in range(n_branches):                 # static unroll over conv branches
        w_ref = branch_refs[2 * b]
        bias_ref = branch_refs[2 * b + 1]
        kd = w_ref.shape[0]
        k = kd // D
        l_out = L - k + 1

        # im2col: one (K*D, L_out) matrix instead of K separate per-tap matmuls.
        xcol = jnp.concatenate([x2[:, j:j + l_out] for j in range(k)], axis=0)

        # scores[t, c] = sum_{j,d} x[d, t+j] * w[c, d, j]  -- single MXU matmul, f32 acc.
        scores = lax.dot_general(
            xcol, w_ref[...],
            dimension_numbers=(((0,), (0,)), ((), ())),
            preferred_element_type=jnp.float32,
        )                                       # (L_out, CP)

        # AdaptiveMaxPool1d(1) over time; bias-add/ReLU commute with the max
        # (relu(z + b) is monotone in z), so pool first -> smaller epilogue.
        pooled = jnp.max(scores, axis=0, keepdims=True)            # (1, CP)
        total = total + jnp.maximum(pooled + bias_ref[...], 0.0)   # disjoint columns => concat

    o_ref[0] = total                            # lane-dense (1, CP) store


def pack_textcnn_params(params_torch, lane_pad=LANE):
    """Pack per-branch PyTorch Conv1d params ((C, D, K) weight, (C,) bias) into
    padded, lane-dense kernel operands with disjoint column ranges per branch."""
    total_c = sum(int(w.shape[0]) for (w, _) in params_torch)
    cp = max(lane_pad, ((total_c + lane_pad - 1) // lane_pad) * lane_pad)
    packed = []
    off = 0
    for (w_cdk, b_c) in params_torch:
        c, d, k = w_cdk.shape
        # w_pad[j*D + d, off + c] = w_cdk[c, d, j]
        w_kd_c = jnp.transpose(w_cdk, (2, 1, 0)).reshape(k * d, c)
        w_pad = jnp.zeros((k * d, cp), jnp.float32).at[:, off:off + c].set(w_kd_c)
        b_pad = jnp.zeros((1, cp), jnp.float32).at[:, off:off + c].set(
            b_c[None, :].astype(jnp.float32))
        packed.append((w_pad, b_pad))
        off += c
    return packed, total_c, cp


def textcnn_encoder(embeddings_ncw, packed_params, total_channels,
                    compute_dtype=jnp.float32):
    """embeddings_ncw: (B, word_dim, seq_len) -- PyTorch NCW layout, consumed directly.
    Returns (B, total_channels) f32, matching Conv1d->ReLU->AdaptiveMaxPool1d(1)->cat."""
    B, D, L = embeddings_ncw.shape
    cp = packed_params[0][0].shape[-1]

    x = embeddings_ncw.astype(compute_dtype)
    inputs = [x]
    in_specs = [pl.BlockSpec((1, D, L), lambda i: (i, 0, 0))]

    flops = 0
    bytes_accessed = x.size * x.dtype.itemsize + B * cp * 4
    for (w_pad, b_pad) in packed_params:
        w = w_pad.astype(compute_dtype)      # bf16 MXU operands on v6e/v7x if requested
        inputs += [w, b_pad]                 # bias / epilogue stay f32 (v5e-friendly)
        in_specs += [
            pl.BlockSpec(w.shape, lambda i: (0, 0)),
            pl.BlockSpec(b_pad.shape, lambda i: (0, 0)),
        ]
        kd = w.shape[0]
        l_out = L - kd // D + 1
        flops += 2 * B * l_out * kd * cp
        bytes_accessed += w.size * w.dtype.itemsize + b_pad.size * 4

    out = pl.pallas_call(
        _textcnn_fused_kernel,
        out_shape=jax.ShapeDtypeStruct((B, 1, cp), jnp.float32),
        grid=(B,),
        in_specs=in_specs,
        out_specs=pl.BlockSpec((1, 1, cp), lambda i: (i, 0, 0)),
        compiler_params=pltpu.CompilerParams(dimension_semantics=("parallel",)),
        cost_estimate=pl.CostEstimate(flops=flops, transcendentals=0,
                                      bytes_accessed=bytes_accessed),
    )(*inputs)
    return out.reshape(B, cp)[:, :total_channels]


# ---------------------------------------------------------------------------
# Pure-JAX reference (mirrors torch: conv1d -> relu -> adaptive max pool -> cat)
# ---------------------------------------------------------------------------
def ref_forward(x_ncw, params_torch):
    outs = []
    for (w_cdk, b_c) in params_torch:
        c, d, k = w_cdk.shape
        B, _, L = x_ncw.shape
        l_out = L - k + 1
        y = jnp.stack(
            [jnp.einsum('bdk,cdk->bc', x_ncw[:, :, t:t + k], w_cdk) for t in range(l_out)],
            axis=-1,
        ) + b_c[None, :, None]
        y = jnp.maximum(y, 0.0)
        outs.append(jnp.max(y, axis=-1))
    return jnp.concatenate(outs, axis=1)


if __name__ == "__main__":
    # Small shapes consistent with the module's forward pass.
    word_dim = 32
    seq_len = 16
    batch = 2
    num_channels = [8, 8]
    kernel_sizes = [3, 5]

    key = jax.random.PRNGKey(0)
    k_x, *k_params = jax.random.split(key, 1 + 2 * len(num_channels))

    # Input in PyTorch NCW layout: (batch, word_dim, seq_len)
    embeddings = jax.random.normal(k_x, (batch, word_dim, seq_len), dtype=jnp.float32)

    params_torch = []   # (C, D, K) weight + (C,) bias, PyTorch layout
    for idx, (c, ksz) in enumerate(zip(num_channels, kernel_sizes)):
        kw, kb = k_params[2 * idx], k_params[2 * idx + 1]
        w_cdk = 0.1 * jax.random.normal(kw, (c, word_dim, ksz), dtype=jnp.float32)
        b_c = 0.1 * jax.random.normal(kb, (c,), dtype=jnp.float32)
        params_torch.append((w_cdk, b_c))

    packed, total_c, _ = pack_textcnn_params(params_torch)
    ref = ref_forward(embeddings, params_torch)

    # f32 path: exact forward-pass semantics of the PyTorch module.
    out = textcnn_encoder(embeddings, packed, total_c)
    out = jax.block_until_ready(out)
    assert out.shape == (batch, sum(num_channels)), out.shape
    assert jnp.allclose(out, ref, rtol=1e-5, atol=1e-5), (out, ref)

    # bf16-operand path (v6e/v7x MXU friendly): f32 accumulation + f32 epilogue.
    out_bf16 = textcnn_encoder(embeddings, packed, total_c, compute_dtype=jnp.bfloat16)
    out_bf16 = jax.block_until_ready(out_bf16)
    assert out_bf16.shape == (batch, sum(num_channels)), out_bf16.shape
    assert jnp.allclose(out_bf16, ref, rtol=5e-2, atol=5e-2), (out_bf16, ref)

    print("KERNEL_OK")
</pallas_src>

<mosaic_0001>
module attributes {stable_mosaic.version = 11 : i64} {
  func.func @_textcnn_fused_kernel(%arg0: i32, %arg1: memref<1x32x16xf32, #tpu.memory_space<vmem>>, %arg2: memref<96x128xf32, #tpu.memory_space<vmem>>, %arg3: memref<1x128xf32, #tpu.memory_space<vmem>>, %arg4: memref<160x128xf32, #tpu.memory_space<vmem>>, %arg5: memref<1x128xf32, #tpu.memory_space<vmem>>, %arg6: memref<1x1x128xf32, #tpu.memory_space<vmem>>) attributes {dimension_semantics = [#tpu.dimension_semantics<parallel>], iteration_bounds = array<i64: 2>, scalar_prefetch = 0 : i64, scratch_operands = 0 : i64, tpu.core_type = #tpu.core_type<tc>, window_params = [{transform_indices = @transform_0, window_bounds = array<i64: 1, 32, 16>}, {pipeline_mode = #tpu.pipeline_mode<synchronous>, transform_indices = @transform_1, window_bounds = array<i64: 96, 128>}, {pipeline_mode = #tpu.pipeline_mode<synchronous>, transform_indices = @transform_2, window_bounds = array<i64: 1, 128>}, {pipeline_mode = #tpu.pipeline_mode<synchronous>, transform_indices = @transform_3, window_bounds = array<i64: 160, 128>}, {pipeline_mode = #tpu.pipeline_mode<synchronous>, transform_indices = @transform_4, window_bounds = array<i64: 1, 128>}, {transform_indices = @transform_5, window_bounds = array<i64: 1, 1, 128>}]} {
    %c0 = arith.constant 0 : index
    %c0_0 = arith.constant 0 : index
    %c0_1 = arith.constant 0 : index
    %0 = vector.load %arg1[%c0, %c0_0, %c0_1] : memref<1x32x16xf32, #tpu.memory_space<vmem>>, vector<1x32x16xf32>
    %1 = vector.shape_cast %0 : vector<1x32x16xf32> to vector<32x16xf32>
    %cst = arith.constant 0.000000e+00 : f32
    %2 = vector.broadcast %cst : f32 to vector<1x128xf32>
    %3 = vector.extract_strided_slice %1 {offsets = [0, 0], sizes = [32, 14], strides = [1, 1]} : vector<32x16xf32> to vector<32x14xf32>
    %4 = vector.extract_strided_slice %1 {offsets = [0, 1], sizes = [32, 14], strides = [1, 1]} : vector<32x16xf32> to vector<32x14xf32>
    %5 = vector.extract_strided_slice %1 {offsets = [0, 2], sizes = [32, 14], strides = [1, 1]} : vector<32x16xf32> to vector<32x14xf32>
    %6 = tpu.concatenate %3, %4, %5 in 0 : vector<32x14xf32>, vector<32x14xf32>, vector<32x14xf32> -> vector<96x14xf32>
    %c0_2 = arith.constant 0 : index
    %c0_3 = arith.constant 0 : index
    %7 = vector.load %arg2[%c0_2, %c0_3] : memref<96x128xf32, #tpu.memory_space<vmem>>, vector<96x128xf32>
    %cst_4 = arith.constant dense<0.000000e+00> : vector<14x128xf32>
    %8 = tpu.matmul %6, %7, %cst_4 {dimension_numbers = #tpu.dot_dimension_numbers<[0], [0], [1], [1], [0, 1, 1, 1], [], []>} : vector<96x14xf32>, vector<96x128xf32>, vector<14x128xf32> -> vector<14x128xf32>
    %cst_5 = arith.constant dense<0xFF800000> : vector<128xf32>
    %9 = vector.multi_reduction <maximumf>, %8, %cst_5 [0] : vector<14x128xf32> to vector<128xf32>
    %10 = vector.shape_cast %9 : vector<128xf32> to vector<1x128xf32>
    %c0_6 = arith.constant 0 : index
    %c0_7 = arith.constant 0 : index
    %11 = vector.load %arg3[%c0_6, %c0_7] : memref<1x128xf32, #tpu.memory_space<vmem>>, vector<1x128xf32>
    %12 = arith.addf %10, %11 : vector<1x128xf32>
    %cst_8 = arith.constant 0.000000e+00 : f32
    %13 = vector.broadcast %cst_8 : f32 to vector<1x128xf32>
    %14 = arith.maximumf %12, %13 : vector<1x128xf32>
    %15 = arith.addf %2, %14 : vector<1x128xf32>
    %16 = vector.extract_strided_slice %1 {offsets = [0, 0], sizes = [32, 12], strides = [1, 1]} : vector<32x16xf32> to vector<32x12xf32>
    %17 = vector.extract_strided_slice %1 {offsets = [0, 1], sizes = [32, 12], strides = [1, 1]} : vector<32x16xf32> to vector<32x12xf32>
    %18 = vector.extract_strided_slice %1 {offsets = [0, 2], sizes = [32, 12], strides = [1, 1]} : vector<32x16xf32> to vector<32x12xf32>
    %19 = vector.extract_strided_slice %1 {offsets = [0, 3], sizes = [32, 12], strides = [1, 1]} : vector<32x16xf32> to vector<32x12xf32>
    %20 = vector.extract_strided_slice %1 {offsets = [0, 4], sizes = [32, 12], strides = [1, 1]} : vector<32x16xf32> to vector<32x12xf32>
    %21 = tpu.concatenate %16, %17, %18, %19, %20 in 0 : vector<32x12xf32>, vector<32x12xf32>, vector<32x12xf32>, vector<32x12xf32>, vector<32x12xf32> -> vector<160x12xf32>
    %c0_9 = arith.constant 0 : index
    %c0_10 = arith.constant 0 : index
    %22 = vector.load %arg4[%c0_9, %c0_10] : memref<160x128xf32, #tpu.memory_space<vmem>>, vector<160x128xf32>
    %cst_11 = arith.constant dense<0.000000e+00> : vector<12x128xf32>
    %23 = tpu.matmul %21, %22, %cst_11 {dimension_numbers = #tpu.dot_dimension_numbers<[0], [0], [1], [1], [0, 1, 1, 1], [], []>} : vector<160x12xf32>, vector<160x128xf32>, vector<12x128xf32> -> vector<12x128xf32>
    %cst_12 = arith.constant dense<0xFF800000> : vector<128xf32>
    %24 = vector.multi_reduction <maximumf>, %23, %cst_12 [0] : vector<12x128xf32> to vector<128xf32>
    %25 = vector.shape_cast %24 : vector<128xf32> to vector<1x128xf32>
    %c0_13 = arith.constant 0 : index
    %c0_14 = arith.constant 0 : index
    %26 = vector.load %arg5[%c0_13, %c0_14] : memref<1x128xf32, #tpu.memory_space<vmem>>, vector<1x128xf32>
    %27 = arith.addf %25, %26 : vector<1x128xf32>
    %cst_15 = arith.constant 0.000000e+00 : f32
    %28 = vector.broadcast %cst_15 : f32 to vector<1x128xf32>
    %29 = arith.maximumf %27, %28 : vector<1x128xf32>
    %30 = arith.addf %15, %29 : vector<1x128xf32>
    %c0_16 = arith.constant 0 : index
    %c0_17 = arith.constant 0 : index
    %c0_18 = arith.constant 0 : index
    %31 = vector.load %arg6[%c0_16, %c0_17, %c0_18] : memref<1x1x128xf32, #tpu.memory_space<vmem>>, vector<1x1x128xf32>
    %32 = vector.shape_cast %31 : vector<1x1x128xf32> to vector<1x128xf32>
    %33 = vector.shape_cast %30 : vector<1x128xf32> to vector<1x1x128xf32>
    tpu.vector_store %arg6[%c0_16, %c0_17, %c0_18], %33 {strides = array<i32>} : memref<1x1x128xf32, #tpu.memory_space<vmem>>, vector<1x1x128xf32>,
    return
  }
  func.func @transform_0(%arg0: i32) -> (i32, i32, i32) {
    %c0_i32 = arith.constant 0 : i32
    %c0_i32_0 = arith.constant 0 : i32
    %c0_i32_1 = arith.constant 0 : i32
    return %arg0, %c0_i32, %c0_i32_0 : i32, i32, i32
  }
  func.func @transform_1(%arg0: i32) -> (i32, i32) {
    %c0_i32 = arith.constant 0 : i32
    %c0_i32_0 = arith.constant 0 : i32
    %c0_i32_1 = arith.constant 0 : i32
    return %c0_i32, %c0_i32_0 : i32, i32
  }
  func.func @transform_2(%arg0: i32) -> (i32, i32) {
    %c0_i32 = arith.constant 0 : i32
    %c0_i32_0 = arith.constant 0 : i32
    %c0_i32_1 = arith.constant 0 : i32
    return %c0_i32, %c0_i32_0 : i32, i32
  }
  func.func @transform_3(%arg0: i32) -> (i32, i32) {
    %c0_i32 = arith.constant 0 : i32
    %c0_i32_0 = arith.constant 0 : i32
    %c0_i32_1 = arith.constant 0 : i32
    return %c0_i32, %c0_i32_0 : i32, i32
  }
  func.func @transform_4(%arg0: i32) -> (i32, i32) {
    %c0_i32 = arith.constant 0 : i32
    %c0_i32_0 = arith.constant 0 : i32
    %c0_i32_1 = arith.constant 0 : i32
    return %c0_i32, %c0_i32_0 : i32, i32
  }
  func.func @transform_5(%arg0: i32) -> (i32, i32, i32) {
    %c0_i32 = arith.constant 0 : i32
    %c0_i32_0 = arith.constant 0 : i32
    %c0_i32_1 = arith.constant 0 : i32
    return %arg0, %c0_i32, %c0_i32_0 : i32, i32, i32
  }
}

</mosaic_0001>

<llo_original>
// kernel: tpu_custom_call.1
$region0: #{tpu_custom_call.1}
  #allocation0 [shape = 'u32[]', space=smem, size = 0x4, offset = 0x4, fixed_abs, tag = 'smem constant byte address 0x4 - core index']
  #allocation1 [shape = 'u32[144,128]{1,0:T(1,128)}', space=vmem, size = 0x12000, scoped, tag = 'internal scratch']
  %s0 = inlined_call_operand.vmem [shape: f32[2,32,16], index: 0, kind: input, shape index: {}]
  %s1 = inlined_call_operand.vmem [shape: f32[96,128], index: 1, kind: input, shape index: {}]
  %s2 = inlined_call_operand.vmem [shape: f32[1,128], index: 2, kind: input, shape index: {}]
  %s3 = inlined_call_operand.hbm [shape: f32[160,128], index: 3, kind: input, shape index: {}]
  %s4 = inlined_call_operand.vmem [shape: f32[1,128], index: 4, kind: input, shape index: {}]
  %s5 = inlined_call_operand.hbm [shape: f32[2,1,128], index: 5, kind: output, shape index: {}]
  %s6 = sld [smem:[#allocation0]]
  $region57: #{tpu_custom_call.1} parent=0
    _
  %s8 = ssub.s32 1, %s6
  %s9 = scalar_select 0, %s8, %s6
  $region1: #{tpu_custom_call.1} parent=0
    #allocation2 [shape = 'u8[81920]{0}', space=vmem, size = 0x14000, scoped, tag = 'input window, operand 3, single buffered']
    #allocation3 [shape = 's32[2]{0}', space=sflag, size = 0x8, scoped, tag = 'scoped memory for tpu_custom_call.1']
    #allocation4 [shape = 's32[2]{0}', space=sflag, size = 0x8, scoped, tag = 'scoped memory for tpu_custom_call.1']
    #allocation5 [shape = 'u8[1024]{0}', space=vmem, size = 0x400, scoped, tag = 'output window, operand 0']
    %10 = vsyncpa [#allocation3], 0
    %11 = vsyncpa [#allocation4], 0
    %s12 = scalar_lea.sflag [#allocation4], 1
    %13 = vsyncpa %s12, 0
    loop: start=0, step=1, limit=4
    $region2: #{tpu_custom_call.1} parent=1 // loop_pre_header
      _
    $region3: #{tpu_custom_call.1} parent=1 // loop_header
      %s15 = sphi 0, %s19
      %p16 = scmp.ge.s32.totalorder %s15, 4
      %s25 = sphi 0, %s27
      %s28 = sphi 0, %s25
      %s29 = sphi 0, %s28
      %s45 = sphi 0, %s29
      %s49 = sphi 0, %s49
      %s51 = sphi 0, %s49
      %s52 = sphi 0, %s51
      %s66 = sphi 0, %s52
      %s70 = sphi 0, %s70
      %s72 = sphi 0, %s70
      %s73 = sphi 0, %s72
      %s87 = sphi 0, %s73
      %s91 = sphi 0, %s91
      %s93 = sphi 0, %s91
      %s94 = sphi 0, %s93
      %s108 = sphi 0, %s94
      %s112 = sphi 0, %s112
      %s114 = sphi 0, %s112
      %s115 = sphi 0, %s114
      %s129 = sphi 0, %s115
      %s135 = sphi 0, %s137
      %s138 = sphi 0, %s135
      %s139 = sphi 0, %s138
      %s155 = sphi 0, %s139
    $region4: #{tpu_custom_call.1} parent=1 // loop_header_branch
      %18 = sbr.rel (%p16) target = $region8
    $region5: #{tpu_custom_call.1} parent=1 // loop_body
      %s20 = ssub.s32 %s15, 1
      %s21 = ssub.s32 %s15, 2
      %s22 = sadd.s32 %s15, 1
      %s23 = ssub.s32 %s15, %s22
      %p24 = scmp.eq.s32.totalorder %s23, 0
      %s26 = sadd.s32 %s25, 1
      %s27 = scalar_select %p24, %s25, %s26
      %p30 = pneg %p24
      %p31 = scmp.eq.s32.totalorder %s15, 1
      %p32 = por %p30, %p31
      %p33 = scmp.ne.s32.totalorder %s25, %s28
      %p34 = scmp.eq.s32.totalorder %s15, 0
      %p35 = por %p33, %p34
      %p36 = scmp.ne.s32.totalorder %s25, %s28
      %p37 = scmp.eq.s32.totalorder %s20, 1
      %p38 = por %p36, %p37
      %p39 = scmp.ne.s32.totalorder %s28, %s29
      %p40 = scmp.eq.s32.totalorder %s20, 0
      %p41 = por %p39, %p40
      %p42 = scmp.ne.s32.totalorder %s28, %s29
      %p43 = scmp.eq.s32.totalorder %s21, 1
      %p44 = por %p42, %p43
      %p46 = scmp.ne.s32.totalorder %s29, %s45
      %p47 = scmp.eq.s32.totalorder %s21, 0
      %p48 = por %p46, %p47
      %s50 = sadd.s32 %s49, 1
      %p53 = scmp.eq.s32.totalorder %s15, 1
      %p54 = scmp.ne.s32.totalorder %s49, %s51
      %p55 = scmp.eq.s32.totalorder %s15, 0
      %p56 = por %p54, %p55
      %p57 = scmp.ne.s32.totalorder %s49, %s51
      %p58 = scmp.eq.s32.totalorder %s20, 1
      %p59 = por %p57, %p58
      %p60 = scmp.ne.s32.totalorder %s51, %s52
      %p61 = scmp.eq.s32.totalorder %s20, 0
      %p62 = por %p60, %p61
      %p63 = scmp.ne.s32.totalorder %s51, %s52
      %p64 = scmp.eq.s32.totalorder %s21, 1
      %p65 = por %p63, %p64
      %p67 = scmp.ne.s32.totalorder %s52, %s66
      %p68 = scmp.eq.s32.totalorder %s21, 0
      %p69 = por %p67, %p68
      %s71 = sadd.s32 %s70, 1
      %p74 = scmp.eq.s32.totalorder %s15, 1
      %p75 = scmp.ne.s32.totalorder %s70, %s72
      %p76 = scmp.eq.s32.totalorder %s15, 0
      %p77 = por %p75, %p76
      %p78 = scmp.ne.s32.totalorder %s70, %s72
      %p79 = scmp.eq.s32.totalorder %s20, 1
      %p80 = por %p78, %p79
      %p81 = scmp.ne.s32.totalorder %s72, %s73
      %p82 = scmp.eq.s32.totalorder %s20, 0
      %p83 = por %p81, %p82
      %p84 = scmp.ne.s32.totalorder %s72, %s73
      %p85 = scmp.eq.s32.totalorder %s21, 1
      %p86 = por %p84, %p85
      %p88 = scmp.ne.s32.totalorder %s73, %s87
      %p89 = scmp.eq.s32.totalorder %s21, 0
      %p90 = por %p88, %p89
      %s92 = sadd.s32 %s91, 1
      %p95 = scmp.eq.s32.totalorder %s15, 1
      %p96 = scmp.ne.s32.totalorder %s91, %s93
      %p97 = scmp.eq.s32.totalorder %s15, 0
      %p98 = por %p96, %p97
      %p99 = scmp.ne.s32.totalorder %s91, %s93
      %p100 = scmp.eq.s32.totalorder %s20, 1
      %p101 = por %p99, %p100
      %p102 = scmp.ne.s32.totalorder %s93, %s94
      %p103 = scmp.eq.s32.totalorder %s20, 0
      %p104 = por %p102, %p103
      %p105 = scmp.ne.s32.totalorder %s93, %s94
      %p106 = scmp.eq.s32.totalorder %s21, 1
      %p107 = por %p105, %p106
      %p109 = scmp.ne.s32.totalorder %s94, %s108
      %p110 = scmp.eq.s32.totalorder %s21, 0
      %p111 = por %p109, %p110
      %s113 = sadd.s32 %s112, 1
      %p116 = scmp.eq.s32.totalorder %s15, 1
      %p117 = scmp.ne.s32.totalorder %s112, %s114
      %p118 = scmp.eq.s32.totalorder %s15, 0
      %p119 = por %p117, %p118
      %p120 = scmp.ne.s32.totalorder %s112, %s114
      %p121 = scmp.eq.s32.totalorder %s20, 1
      %p122 = por %p120, %p121
      %p123 = scmp.ne.s32.totalorder %s114, %s115
      %p124 = scmp.eq.s32.totalorder %s20, 0
      %p125 = por %p123, %p124
      %p126 = scmp.ne.s32.totalorder %s114, %s115
      %p127 = scmp.eq.s32.totalorder %s21, 1
      %p128 = por %p126, %p127
      %p130 = scmp.ne.s32.totalorder %s115, %s129
      %p131 = scmp.eq.s32.totalorder %s21, 0
      %p132 = por %p130, %p131
      %s133 = ssub.s32 %s15, %s22
      %p134 = scmp.eq.s32.totalorder %s133, 0
      %s136 = sadd.s32 %s135, 1
      %s137 = scalar_select %p134, %s135, %s136
      %p140 = pneg %p134
      %p141 = scmp.eq.s32.totalorder %s15, 1
      %p142 = por %p140, %p141
      %p143 = scmp.ne.s32.totalorder %s135, %s138
      %p144 = scmp.eq.s32.totalorder %s15, 0
      %p145 = por %p143, %p144
      %p146 = scmp.ne.s32.totalorder %s135, %s138
      %p147 = scmp.eq.s32.totalorder %s20, 1
      %p148 = por %p146, %p147
      %p149 = scmp.ne.s32.totalorder %s138, %s139
      %p150 = scmp.eq.s32.totalorder %s20, 0
      %p151 = por %p149, %p150
      %p152 = scmp.ne.s32.totalorder %s138, %s139
      %p153 = scmp.eq.s32.totalorder %s21, 1
      %p154 = por %p152, %p153
      %p156 = scmp.ne.s32.totalorder %s139, %s155
      %p157 = scmp.eq.s32.totalorder %s21, 0
      %p158 = por %p156, %p157
      %p159 = scmp.le.s32.totalorder 1, %s15
      %p160 = scmp.lt.s32.totalorder %s15, 3
      %p161 = pnand %p159, %p160
      %p162 = pneg %p161
      // Predicated region
      $region9: #{tpu_custom_call.1} parent=5 // pred_check
        _
      $region10: #{tpu_custom_call.1} parent=5 // pred_check_branch
        %164 = sbr.rel (%p161) target = $region12
      $region11: #{tpu_custom_call.1} parent=5 // pred_region
        %s165 = ssub.s32 %s15, 1
        // Predicated region
        $region13: #{tpu_custom_call.1} parent=11 // pred_check
          %p166 = pneg %p62
        $region14: #{tpu_custom_call.1} parent=11 // pred_check_branch
          %168 = sbr.rel (%p166) target = $region16
        $region15: #{tpu_custom_call.1} parent=11 // pred_region
          _
        $region16: #{tpu_custom_call.1} parent=11 // pred_fallthru
          _
        // Predicated region
        $region17: #{tpu_custom_call.1} parent=11 // pred_check
          %p169 = pneg %p83
        $region18: #{tpu_custom_call.1} parent=11 // pred_check_branch
          %171 = sbr.rel (%p169) target = $region20
        $region19: #{tpu_custom_call.1} parent=11 // pred_region
          _
        $region20: #{tpu_custom_call.1} parent=11 // pred_fallthru
          _
        // Predicated region
        $region21: #{tpu_custom_call.1} parent=11 // pred_check
          %p172 = pneg %p104
        $region22: #{tpu_custom_call.1} parent=11 // pred_check_branch
          %174 = sbr.rel (%p172) target = $region24
        $region23: #{tpu_custom_call.1} parent=11 // pred_region
          %s176 = ssub.s32 2560, 2560
          %177 = vsyncadd [#allocation3], %s176
          %s178 = sshll.u32 [#allocation2], 4
          %s179 = int_to_ptr.vmem [resolvable:$true] %s178
          %184 = dma.hbm_to_vmem [thread:$0]  %s3, 2560, %s179, [#allocation3], 128, 128, 8
        $region24: #{tpu_custom_call.1} parent=11 // pred_fallthru
          _
        // Predicated region
        $region25: #{tpu_custom_call.1} parent=11 // pred_check
          %p185 = pneg %p125
        $region26: #{tpu_custom_call.1} parent=11 // pred_check_branch
          %187 = sbr.rel (%p185) target = $region28
        $region27: #{tpu_custom_call.1} parent=11 // pred_region
          _
        $region28: #{tpu_custom_call.1} parent=11 // pred_fallthru
          _
      $region12: #{tpu_custom_call.1} parent=5 // pred_fallthru
        _
      %p188 = scmp.lt.s32.totalorder %s15, 2
      // Predicated region
      $region29: #{tpu_custom_call.1} parent=5 // pred_check
        %p189 = pneg %p188
      $region30: #{tpu_custom_call.1} parent=5 // pred_check_branch
        %191 = sbr.rel (%p189) target = $region32
      $region31: #{tpu_custom_call.1} parent=5 // pred_region
        // Predicated region
        $region33: #{tpu_custom_call.1} parent=31 // pred_check
          %p192 = pneg %p35
        $region34: #{tpu_custom_call.1} parent=31 // pred_check_branch
          %194 = sbr.rel (%p192) target = $region36
        $region35: #{tpu_custom_call.1} parent=31 // pred_region
          %p195 = scmp.lt.s32.totalorder %s15, 1
          %s196 = scalar_select %p195, %s15, 1
          %s197 = smul.addr %s196, 4
          %s198 = smul.addr %s197, 8
          %s199 = scalar_lea.vmem %s0, %s198
        $region36: #{tpu_custom_call.1} parent=31 // pred_fallthru
          _
      $region32: #{tpu_custom_call.1} parent=5 // pred_fallthru
        _
      %p200 = scmp.le.s32.totalorder 1, %s15
      %p201 = scmp.lt.s32.totalorder %s15, 3
      %p202 = pnand %p200, %p201
      %p203 = pneg %p202
      // Predicated region
      $region37: #{tpu_custom_call.1} parent=5 // pred_check
        _
      $region38: #{tpu_custom_call.1} parent=5 // pred_check_branch
        %205 = sbr.rel (%p202) target = $region40
      $region39: #{tpu_custom_call.1} parent=5 // pred_region
        %s206 = ssub.s32 %s15, 1
        // Predicated region
        $region41: #{tpu_custom_call.1} parent=39 // pred_check
          %p207 = pneg %p104
        $region42: #{tpu_custom_call.1} parent=39 // pred_check_branch
          %209 = sbr.rel (%p207) target = $region44
        $region43: #{tpu_custom_call.1} parent=39 // pred_region
          %210 = dma.done [#allocation3], 2560
        $region44: #{tpu_custom_call.1} parent=39 // pred_fallthru
          _
        %p211 = scmp.lt.s32.totalorder %s20, 1
        %s212 = scalar_select %p211, %s20, 1
        %s213 = smul.addr %s212, 4
        %s214 = smul.addr %s213, 8
        %s215 = scalar_lea.vmem %s0, %s214
        %p216 = pneg %p41
        %p217 = pneg %p38
        %p218 = pneg %p62
        %p219 = pneg %p59
        %p220 = pneg %p83
        %p221 = pneg %p80
        %p222 = pneg %p104
        %p223 = pneg %p101
        %p224 = pneg %p125
        %p225 = pneg %p122
        %p226 = pneg %p151
        %p227 = pneg %p148
        %s228 = sand.u32 %s138, 1
        %s229 = scalar_lea.sflag [#allocation4], %s228
        %s230 = sand.u32 %s138, 1
        %s231 = scalar_lea.vmem [#allocation5], %s230
        %p232 = scmp.lt.s32.totalorder %s20, 1
        %s233 = scalar_select %p232, %s20, 1
        %s234 = smul.addr %s233, 4
        %s235 = smul.addr %s234, 8
        %s236 = scalar_lea.vmem %s0, %s235
        %v237 = vld [vmem:[%s236] sm:$0xff]
        %v238 = vld [vmem:[%s236 + $0x8] sm:$0xff]
        %v239 = vld [vmem:[%s236 + $0x10] sm:$0xff]
        %v240 = vld [vmem:[%s236 + $0x18] sm:$0xff]
        %245 = vrot.lane.b32.xlu0 %v237, 127
        %v246 = vpop.permute.xlu0 %245
        %247 = vrot.lane.b32.xlu0 %v238, 127
        %v248 = vpop.permute.xlu0 %247
        %249 = vrot.lane.b32.xlu0 %v239, 127
        %v250 = vpop.permute.xlu0 %249
        %251 = vrot.lane.b32.xlu0 %v240, 127
        %v252 = vpop.permute.xlu0 %251
        %257 = vrot.lane.b32.xlu0 %v237, 126
        %v258 = vpop.permute.xlu0 %257
        %259 = vrot.lane.b32.xlu0 %v238, 126
        %v260 = vpop.permute.xlu0 %259
        %261 = vrot.lane.b32.xlu0 %v239, 126
        %v262 = vpop.permute.xlu0 %261
        %263 = vrot.lane.b32.xlu0 %v240, 126
        %v264 = vpop.permute.xlu0 %263
        %v269 = vld [vmem:[%s1] sm:$0xff]
        %v270 = vld [vmem:[%s1 + $0x8] sm:$0xff]
        %v271 = vld [vmem:[%s1 + $0x10] sm:$0xff]
        %v272 = vld [vmem:[%s1 + $0x18] sm:$0xff]
        %v273 = vld [vmem:[%s1 + $0x20] sm:$0xff]
        %v274 = vld [vmem:[%s1 + $0x28] sm:$0xff]
        %v275 = vld [vmem:[%s1 + $0x30] sm:$0xff]
        %v276 = vld [vmem:[%s1 + $0x38] sm:$0xff]
        %v277 = vld [vmem:[%s1 + $0x40] sm:$0xff]
        %v278 = vld [vmem:[%s1 + $0x48] sm:$0xff]
        %v279 = vld [vmem:[%s1 + $0x50] sm:$0xff]
        %v280 = vld [vmem:[%s1 + $0x58] sm:$0xff]
        %281 = vxpose.xlu0.b32.start [1/16] %v237, 128
        %282 = vxpose.xlu0.b32.cont [2/16] %v238, 128
        %283 = vxpose.xlu0.b32.cont [3/16] %v239, 128
        %284 = vxpose.xlu0.b32.cont [4/16] %v240, 128
        %285 = vxpose.xlu0.b32.cont [5/16] %v246, 128
        %286 = vxpose.xlu0.b32.cont [6/16] %v248, 128
        %287 = vxpose.xlu0.b32.cont [7/16] %v250, 128
        %288 = vxpose.xlu0.b32.cont [8/16] %v252, 128
        %289 = vxpose.xlu0.b32.cont [9/16] %v258, 128
        %290 = vxpose.xlu0.b32.cont [10/16] %v260, 128
        %291 = vxpose.xlu0.b32.cont [11/16] %v262, 128
        %292 = vxpose.xlu0.b32.cont [12/16] %v264, 128
        %293 = vxpose.xlu0.b32.cont [13/16] 0.0, 128
        %294 = vxpose.xlu0.b32.cont [14/16] 0.0, 128
        %295 = vxpose.xlu0.b32.cont [15/16] 0.0, 128
        %296 = vxpose.xlu0.b32.end [16/16] 0.0, 128
        %v297 = vpop.trf.xlu0
        %v298 = vpop.trf.xlu0
        %v299 = vpop.trf.xlu0
        %v300 = vpop.trf.xlu0
        %v301 = vpop.trf.xlu0
        %v302 = vpop.trf.xlu0
        %v303 = vpop.trf.xlu0
        %v304 = vpop.trf.xlu0
        %v305 = vpop.trf.xlu0
        %v306 = vpop.trf.xlu0
        %v307 = vpop.trf.xlu0
        %v308 = vpop.trf.xlu0
        %v309 = vpop.trf.xlu0
        %v310 = vpop.trf.xlu0
        %v311 = vpop.trf.xlu0
        %v312 = vpop.trf.xlu0
        %vm313 = vcmask 785408
        %v315 = vsel %vm313, %v297, 0
        %v318 = vsel %vm313, %v298, 0
        %320 = vmatprep.subr.mxu0 0.0
        %321 = vmatpush1.msra.mxu0 %v269
        %322 = vmatprep.subr.mxu0 0.0
        %323 = vmatpush1.msra.mxu0 %v270
        %324 = vmatprep.subr.mxu0 0.0
        %325 = vmatpush1.msra.mxu0 %v271
        %326 = vmatprep.subr.mxu0 0.0
        %327 = vmatpush1.msra.mxu0 %v272
        %328 = vmatprep.subr.mxu0 0.0
        %329 = vmatpush1.msra.mxu0 %v273
        %330 = vmatprep.subr.mxu0 0.0
        %331 = vmatpush1.msra.mxu0 %v274
        %332 = vmatprep.subr.mxu0 0.0
        %333 = vmatpush1.msra.mxu0 %v275
        %334 = vmatprep.subr.mxu0 0.0
        %335 = vmatpush1.msra.mxu0 %v276
        %336 = vmatprep.subr.mxu0 0.0
        %337 = vmatpush1.msra.mxu0 %v277
        %338 = vmatprep.subr.mxu0 0.0
        %339 = vmatpush1.msra.mxu0 %v278
        %340 = vmatprep.subr.mxu0 0.0
        %341 = vmatpush1.msra.mxu0 %v279
        %342 = vmatprep.subr.mxu0 0.0
        %343 = vmatpush1.msra.mxu0 %v280
        %344 = vmatprep.subr.mxu0 0.0
        %345 = vmatpush1.msra.mxu0 0.0
        %346 = vmatprep.subr.mxu0 0.0
        %347 = vmatpush1.msra.mxu0 0.0
        %348 = vmatprep.subr.mxu0 0.0
        %349 = vmatpush1.msra.mxu0 0.0
        %350 = vmatprep.subr.mxu0 0.0
        %351 = vmatpush1.msra.mxu0 0.0
        %352 = vmatprep.subr.mxu0 0.0
        %353 = vmatpush1.msra.mxu0 0.0
        %354 = vmatprep.subr.mxu0 0.0
        %355 = vmatpush1.msra.mxu0 0.0
        %356 = vmatprep.subr.mxu0 0.0
        %357 = vmatpush1.msra.mxu0 0.0
        %358 = vmatprep.subr.mxu0 0.0
        %359 = vmatpush1.msra.mxu0 0.0
        %360 = vmatprep.subr.mxu0 0.0
        %361 = vmatpush1.msra.mxu0 0.0
        %362 = vmatprep.subr.mxu0 0.0
        %363 = vmatpush1.msra.mxu0 0.0
        %364 = vmatprep.subr.mxu0 0.0
        %365 = vmatpush1.msra.mxu0 0.0
        %366 = vmatprep.subr.mxu0 0.0
        %367 = vmatpush1.msra.mxu0 0.0
        %368 = vmatprep.subr.mxu0 0.0
        %369 = vmatpush1.msra.mxu0 0.0
        %370 = vmatprep.subr.mxu0 0.0
        %371 = vmatpush1.msra.mxu0 0.0
        %372 = vmatprep.subr.mxu0 0.0
        %373 = vmatpush1.msra.mxu0 0.0
        %374 = vmatprep.subr.mxu0 0.0
        %375 = vmatpush1.msra.mxu0 0.0
        %376 = vmatprep.subr.mxu0 0.0
        %377 = vmatpush1.msra.mxu0 0.0
        %378 = vmatprep.subr.mxu0 0.0
        %379 = vmatpush1.msra.mxu0 0.0
        %380 = vmatprep.subr.mxu0 0.0
        %381 = vmatpush1.msra.mxu0 0.0
        %382 = vmatprep.subr.mxu0 0.0
        %383 = vmatpush1.msra.mxu0 0.0
        %384 = vmatprep.mubr.f32.mxu0 0.0
        %385 = vmatmul.mubr.f32.gmra.mrb[0].mxu0 %v315
        %v386 = vpop.f32.mrb[0].mxu0
        %v387 = vadd.f32 0.0, %v386
        %v388 = vpop.f32.mrb[0].mxu0
        %389 = vmatprep.mubr.f32.mxu0 0.0
        %390 = vmatmul.mubr.f32.gmra.mrb[0].mxu0 %v318
        %v391 = vpop.f32.mrb[0].mxu0
        %v392 = vadd.f32 0.0, %v391
        %v393 = vpop.f32.mrb[0].mxu0
        %394 = vdwg.mxu0
        %vm395 = vcmask 1045504
        %v396 = vsel %vm395, %v392, -inf
        %v397 = vmax.f32 %v387, %v396
        %v398 = vrot.slane %v397, 4
        %v399 = vmax.f32 %v397, %v398
        %v400 = vrot.slane %v399, 2
        %v401 = vmax.f32 %v399, %v400
        %v402 = vrot.slane %v401, 1
        %v403 = vmax.f32 %v401, %v402
        %v404 = vld [vmem:[%s2] sm:$0x1]
        %v405 = vadd.f32 %v403, %v404
        %v406 = vmax.f32 %v405, 0.0
        %v407 = vadd.f32 %v406, 0.0
        %408 = vrot.lane.b32.xlu0 %v237, 125
        %v409 = vpop.permute.xlu0 %408
        %410 = vrot.lane.b32.xlu0 %v238, 125
        %v411 = vpop.permute.xlu0 %410
        %412 = vrot.lane.b32.xlu0 %v239, 125
        %v413 = vpop.permute.xlu0 %412
        %414 = vrot.lane.b32.xlu0 %v240, 125
        %v415 = vpop.permute.xlu0 %414
        %420 = vrot.lane.b32.xlu0 %v237, 124
        %v421 = vpop.permute.xlu0 %420
        %422 = vrot.lane.b32.xlu0 %v238, 124
        %v423 = vpop.permute.xlu0 %422
        %424 = vrot.lane.b32.xlu0 %v239, 124
        %v425 = vpop.permute.xlu0 %424
        %426 = vrot.lane.b32.xlu0 %v240, 124
        %v427 = vpop.permute.xlu0 %426
        %v432 = vld [vmem:[#allocation2] sm:$0xff]
        %v433 = vld [vmem:[#allocation2 + $0x8] sm:$0xff]
        %v434 = vld [vmem:[#allocation2 + $0x10] sm:$0xff]
        %v435 = vld [vmem:[#allocation2 + $0x18] sm:$0xff]
        %v436 = vld [vmem:[#allocation2 + $0x20] sm:$0xff]
        %v437 = vld [vmem:[#allocation2 + $0x28] sm:$0xff]
        %v438 = vld [vmem:[#allocation2 + $0x30] sm:$0xff]
        %v439 = vld [vmem:[#allocation2 + $0x38] sm:$0xff]
        %v440 = vld [vmem:[#allocation2 + $0x40] sm:$0xff]
        %v441 = vld [vmem:[#allocation2 + $0x48] sm:$0xff]
        %v442 = vld [vmem:[#allocation2 + $0x50] sm:$0xff]
        %v443 = vld [vmem:[#allocation2 + $0x58] sm:$0xff]
        %v444 = vld [vmem:[#allocation2 + $0x60] sm:$0xff]
        %v445 = vld [vmem:[#allocation2 + $0x68] sm:$0xff]
        %v446 = vld [vmem:[#allocation2 + $0x70] sm:$0xff]
        %v447 = vld [vmem:[#allocation2 + $0x78] sm:$0xff]
        %v448 = vld [vmem:[#allocation2 + $0x80] sm:$0xff]
        %v449 = vld [vmem:[#allocation2 + $0x88] sm:$0xff]
        %v450 = vld [vmem:[#allocation2 + $0x90] sm:$0xff]
        %v451 = vld [vmem:[#allocation2 + $0x98] sm:$0xff]
        %452 = vxpose.xlu0.b32.start [1/16] %v237, 128
        %453 = vxpose.xlu0.b32.cont [2/16] %v238, 128
        %454 = vxpose.xlu0.b32.cont [3/16] %v239, 128
        %455 = vxpose.xlu0.b32.cont [4/16] %v240, 128
        %456 = vxpose.xlu0.b32.cont [5/16] %v246, 128
        %457 = vxpose.xlu0.b32.cont [6/16] %v248, 128
        %458 = vxpose.xlu0.b32.cont [7/16] %v250, 128
        %459 = vxpose.xlu0.b32.cont [8/16] %v252, 128
        %460 = vxpose.xlu0.b32.cont [9/16] %v258, 128
        %461 = vxpose.xlu0.b32.cont [10/16] %v260, 128
        %462 = vxpose.xlu0.b32.cont [11/16] %v262, 128
        %463 = vxpose.xlu0.b32.cont [12/16] %v264, 128
        %464 = vxpose.xlu0.b32.cont [13/16] %v409, 128
        %465 = vxpose.xlu0.b32.cont [14/16] %v411, 128
        %466 = vxpose.xlu0.b32.cont [15/16] %v413, 128
        %467 = vxpose.xlu0.b32.end [16/16] %v415, 128
        %v468 = vpop.trf.xlu0
        %v469 = vpop.trf.xlu0
        %v470 = vpop.trf.xlu0
        %v471 = vpop.trf.xlu0
        %v472 = vpop.trf.xlu0
        %v473 = vpop.trf.xlu0
        %v474 = vpop.trf.xlu0
        %v475 = vpop.trf.xlu0
        %v476 = vpop.trf.xlu0
        %v477 = vpop.trf.xlu0
        %v478 = vpop.trf.xlu0
        %v479 = vpop.trf.xlu0
        %v480 = vpop.trf.xlu0
        %v481 = vpop.trf.xlu0
        %v482 = vpop.trf.xlu0
        %v483 = vpop.trf.xlu0
        %484 = vxpose.xlu0.b32.start [1/16] %v421, 128
        %485 = vxpose.xlu0.b32.cont [2/16] %v423, 128
        %486 = vxpose.xlu0.b32.cont [3/16] %v425, 128
        %487 = vxpose.xlu0.b32.cont [4/16] %v427, 128
        %488 = vxpose.xlu0.b32.cont [5/16] 0.0, 128
        %489 = vxpose.xlu0.b32.cont [6/16] 0.0, 128
        %490 = vxpose.xlu0.b32.cont [7/16] 0.0, 128
        %491 = vxpose.xlu0.b32.cont [8/16] 0.0, 128
        %492 = vxpose.xlu0.b32.cont [9/16] 0.0, 128
        %493 = vxpose.xlu0.b32.cont [10/16] 0.0, 128
        %494 = vxpose.xlu0.b32.cont [11/16] 0.0, 128
        %495 = vxpose.xlu0.b32.cont [12/16] 0.0, 128
        %496 = vxpose.xlu0.b32.cont [13/16] 0.0, 128
        %497 = vxpose.xlu0.b32.cont [14/16] 0.0, 128
        %498 = vxpose.xlu0.b32.cont [15/16] 0.0, 128
        %499 = vxpose.xlu0.b32.end [16/16] 0.0, 128
        %v500 = vpop.trf.xlu0
        %v501 = vpop.trf.xlu0
        %v502 = vpop.trf.xlu0
        %v503 = vpop.trf.xlu0
        %v504 = vpop.trf.xlu0
        %v505 = vpop.trf.xlu0
        %v506 = vpop.trf.xlu0
        %v507 = vpop.trf.xlu0
        %v508 = vpop.trf.xlu0
        %v509 = vpop.trf.xlu0
        %v510 = vpop.trf.xlu0
        %v511 = vpop.trf.xlu0
        %v512 = vpop.trf.xlu0
        %v513 = vpop.trf.xlu0
        %v514 = vpop.trf.xlu0
        %v515 = vpop.trf.xlu0
        %vm516 = vcmask 261120
        %v518 = vsel %vm516, %v500, 0
        %v521 = vsel %vm516, %v501, 0
        %523 = vmatprep.subr.mxu0 0.0
        %524 = vmatpush1.msra.mxu0 %v432
        %525 = vmatprep.subr.mxu0 0.0
        %526 = vmatpush1.msra.mxu0 %v433
        %527 = vmatprep.subr.mxu0 0.0
        %528 = vmatpush1.msra.mxu0 %v434
        %529 = vmatprep.subr.mxu0 0.0
        %530 = vmatpush1.msra.mxu0 %v435
        %531 = vmatprep.subr.mxu0 0.0
        %532 = vmatpush1.msra.mxu0 %v436
        %533 = vmatprep.subr.mxu0 0.0
        %534 = vmatpush1.msra.mxu0 %v437
        %535 = vmatprep.subr.mxu0 0.0
        %536 = vmatpush1.msra.mxu0 %v438
        %537 = vmatprep.subr.mxu0 0.0
        %538 = vmatpush1.msra.mxu0 %v439
        %539 = vmatprep.subr.mxu0 0.0
        %540 = vmatpush1.msra.mxu0 %v440
        %541 = vmatprep.subr.mxu0 0.0
        %542 = vmatpush1.msra.mxu0 %v441
        %543 = vmatprep.subr.mxu0 0.0
        %544 = vmatpush1.msra.mxu0 %v442
        %545 = vmatprep.subr.mxu0 0.0
        %546 = vmatpush1.msra.mxu0 %v443
        %547 = vmatprep.subr.mxu0 0.0
        %548 = vmatpush1.msra.mxu0 %v444
        %549 = vmatprep.subr.mxu0 0.0
        %550 = vmatpush1.msra.mxu0 %v445
        %551 = vmatprep.subr.mxu0 0.0
        %552 = vmatpush1.msra.mxu0 %v446
        %553 = vmatprep.subr.mxu0 0.0
        %554 = vmatpush1.msra.mxu0 %v447
        %555 = vmatprep.subr.mxu0 0.0
        %556 = vmatpush1.msra.mxu0 %v448
        %557 = vmatprep.subr.mxu0 0.0
        %558 = vmatpush1.msra.mxu0 %v449
        %559 = vmatprep.subr.mxu0 0.0
        %560 = vmatpush1.msra.mxu0 %v450
        %561 = vmatprep.subr.mxu0 0.0
        %562 = vmatpush1.msra.mxu0 %v451
        %563 = vmatprep.subr.mxu0 0.0
        %564 = vmatpush1.msra.mxu0 0.0
        %565 = vmatprep.subr.mxu0 0.0
        %566 = vmatpush1.msra.mxu0 0.0
        %567 = vmatprep.subr.mxu0 0.0
        %568 = vmatpush1.msra.mxu0 0.0
        %569 = vmatprep.subr.mxu0 0.0
        %570 = vmatpush1.msra.mxu0 0.0
        %571 = vmatprep.subr.mxu0 0.0
        %572 = vmatpush1.msra.mxu0 0.0
        %573 = vmatprep.subr.mxu0 0.0
        %574 = vmatpush1.msra.mxu0 0.0
        %575 = vmatprep.subr.mxu0 0.0
        %576 = vmatpush1.msra.mxu0 0.0
        %577 = vmatprep.subr.mxu0 0.0
        %578 = vmatpush1.msra.mxu0 0.0
        %579 = vmatprep.subr.mxu0 0.0
        %580 = vmatpush1.msra.mxu0 0.0
        %581 = vmatprep.subr.mxu0 0.0
        %582 = vmatpush1.msra.mxu0 0.0
        %583 = vmatprep.subr.mxu0 0.0
        %584 = vmatpush1.msra.mxu0 0.0
        %585 = vmatprep.subr.mxu0 0.0
        %586 = vmatpush1.msra.mxu0 0.0
        %587 = vmatprep.mubr.f32.mxu0 %v518
        %588 = vmatmul.mubr.f32.gmra.mrb[0].mxu0 %v468
        %v589 = vpop.f32.mrb[0].mxu0
        %v590 = vadd.f32 0.0, %v589
        %v591 = vpop.f32.mrb[0].mxu0
        %592 = vmatprep.mubr.f32.mxu0 %v521
        %593 = vmatmul.mubr.f32.gmra.mrb[0].mxu0 %v469
        %v594 = vpop.f32.mrb[0].mxu0
        %v595 = vadd.f32 0.0, %v594
        %v596 = vpop.f32.mrb[0].mxu0
        %597 = vdwg.mxu0
        %vm598 = vcmask 1043456
        %v599 = vsel %vm598, %v595, -inf
        %v600 = vmax.f32 %v590, %v599
        %v601 = vrot.slane %v600, 4
        %v602 = vmax.f32 %v600, %v601
        %v603 = vrot.slane %v602, 2
        %v604 = vmax.f32 %v602, %v603
        %v605 = vrot.slane %v604, 1
        %v606 = vmax.f32 %v604, %v605
        %v607 = vld [vmem:[%s4] sm:$0x1]
        %v608 = vadd.f32 %v606, %v607
        %v609 = vmax.f32 %v608, 0.0
        %v610 = vadd.f32 %v407, %v609
        %611 = vst [vmem:[%s231] sm:$0x1] %v610
        %s612 = sand.u32 %s138, 1
        %s613 = scalar_lea.sflag [#allocation4], %s612
        %s614 = sand.u32 %s138, 1
        %s615 = scalar_lea.vmem [#allocation5], %s614
        // Predicated region
        $region45: #{tpu_custom_call.1} parent=39 // pred_check
          %p616 = pneg %p148
        $region46: #{tpu_custom_call.1} parent=39 // pred_check_branch
          %618 = sbr.rel (%p616) target = $region48
        $region47: #{tpu_custom_call.1} parent=39 // pred_region
          %s620 = ssub.s32 16, 16
          %621 = vsyncadd %s613, %s620
          %s622 = smul.addr %s20, 16
          %s623 = scalar_lea.hbm %s5, %s622
          %s625 = sshll.u32 %s615, 4
          %s626 = int_to_ptr.vmem [resolvable:$true] %s625
          %628 = dma.vmem_to_hbm [thread:$0]  %s626, 16, %s623, %s613
        $region48: #{tpu_custom_call.1} parent=39 // pred_fallthru
          _
      $region40: #{tpu_custom_call.1} parent=5 // pred_fallthru
        _
      %p629 = scmp.le.s32.totalorder 2, %s15
      // Predicated region
      $region49: #{tpu_custom_call.1} parent=5 // pred_check
        %p630 = pneg %p629
      $region50: #{tpu_custom_call.1} parent=5 // pred_check_branch
        %632 = sbr.rel (%p630) target = $region52
      $region51: #{tpu_custom_call.1} parent=5 // pred_region
        %s633 = ssub.s32 %s15, 2
        // Predicated region
        $region53: #{tpu_custom_call.1} parent=51 // pred_check
          %p634 = pneg %p154
        $region54: #{tpu_custom_call.1} parent=51 // pred_check_branch
          %636 = sbr.rel (%p634) target = $region56
        $region55: #{tpu_custom_call.1} parent=51 // pred_region
          %s637 = sand.u32 %s139, 1
          %s638 = scalar_lea.sflag [#allocation4], %s637
          %s639 = sand.u32 %s139, 1
          %s640 = scalar_lea.vmem [#allocation5], %s639
          %641 = dma.done %s638, 16
        $region56: #{tpu_custom_call.1} parent=51 // pred_fallthru
          _
      $region52: #{tpu_custom_call.1} parent=5 // pred_fallthru
        _
    $region6: #{tpu_custom_call.1} parent=1 // loop_footer
      %s19 = sadd.s32 1, %s15
    $region7: #{tpu_custom_call.1} parent=1 // loop_footer_branch
      %14 = sbr.rel target = $region3
    $region8: #{tpu_custom_call.1} parent=1 // loop_exit
      _
    %642 = vsyncpa [#allocation3], 1
    %s643 = scalar_lea.sflag [#allocation3], 1
    %644 = vsyncpa %s643, 1
    %645 = vsyncpa [#allocation4], 1
    %s646 = scalar_lea.sflag [#allocation4], 1
    %647 = vsyncpa %s646, 1

</llo_original>
